<compile_context>
chip_gen: v6e
topology: v6e:2x2x1
jax: 0.10.0
libtpu: 0.0.40
codegen_flags: <defaults>
</compile_context>

<pallas_src>
import math

import jax
import jax.numpy as jnp
from jax.experimental import pallas as pl
from jax.experimental.pallas import tpu as pltpu


def _quant_dequant_kernel(x_ref, o_ref):
    """clamp(-1,1) -> uint8 quantize -> ToTensor + Normalize(0.5, 0.5)."""
    x = x_ref[...].astype(jnp.float32)
    x = jnp.clip(x, -1.0, 1.0)
    # (x+1)/2*255 + 0.5 == x*127.5 + 128.0 ; after the clip it lies in [0.5, 255.5],
    # so a single floor reproduces torch's float->uint8 truncation (no second clip).
    u = jnp.floor(x * 127.5 + 128.0)
    # u/255 then (v - 0.5)/0.5  ==  u/127.5 - 1
    o_ref[...] = (u * (1.0 / 127.5) - 1.0).astype(o_ref.dtype)


def _round_up(x, m):
    return ((x + m - 1) // m) * m


def _target_block_bytes():
    """Per-generation target block size (bytes) for this bandwidth-bound op."""
    tb = 1 << 20                       # conservative default; safe for v5e (16 MiB scoped)
    kind = ""
    try:
        kind = jax.devices()[0].device_kind.lower()
    except Exception:
        pass
    if "v6" in kind:
        tb = 2 << 20                   # 2 MiB blocks -> 8 MiB double-buffered
    if "v7" in kind or "tpu7" in kind or "7x" in kind:
        tb = 4 << 20                   # 4 MiB blocks -> 16 MiB, under 32 MiB scoped default
    try:
        vmem = getattr(pltpu.get_tpu_info(), "vmem_capacity_bytes", None)
        if vmem:
            # keep 2 arrays x 2 buffers x block well under physical VMEM
            tb = min(tb, max(1 << 20, vmem // 16))
    except Exception:
        pass
    return tb


def mobilefaceswap_forward(image, cover_image=None, *, alias_input=True):
    """Replicates MobileFaceSwap.forward((image, cover_image)).

    `cover_image` is accepted to match the (image, cover) tuple signature but, as in
    the original module, is never used by the computation.
    """
    del cover_image
    orig_shape = image.shape
    orig_dtype = image.dtype
    total = math.prod(orig_shape)
    itemsize = jnp.dtype(orig_dtype).itemsize
    sublane = max(8, 32 // itemsize)           # 8 for f32, 16 for bf16, ...

    # --- lane-dense slab; common path has no pad and no trailing slice.
    tile_c = next((c for c in (512, 256, 128) if total % c == 0), None)
    padded = tile_c is None
    if padded:
        # Rare ragged case: minimal pad up to a multiple of 128 lanes.
        tile_c = 128
        rows = pl.cdiv(total, tile_c)
        flat = jnp.pad(image.reshape(-1), (0, rows * tile_c - total))
        slab = flat.reshape(rows, tile_c)
    else:
        rows = total // tile_c
        slab = image.reshape(rows, tile_c)

    # --- generation-aware block-row selection.
    max_rows = max(sublane,
                   (_target_block_bytes() // (tile_c * itemsize)) // sublane * sublane)
    if rows >= 64:
        # >= ~4 grid steps so ("parallel",) can shard across v7x's 2 TensorCores.
        tile_r = min(max_rows, _round_up(pl.cdiv(rows, 4), sublane))
    else:
        tile_r = rows                           # one full-extent block (always legal)
    grid = (pl.cdiv(rows, tile_r),)

    # In-place alias is valid only on the no-pad path (same layout, same dtype).
    # It only saves HBM footprint when the caller can donate the input buffer;
    # correctness is preserved either way (XLA copies defensively if needed).
    io_aliases = {0: 0} if (alias_input and not padded) else {}

    out_slab = pl.pallas_call(
        _quant_dequant_kernel,
        out_shape=jax.ShapeDtypeStruct((rows, tile_c), orig_dtype),
        grid=grid,
        in_specs=[pl.BlockSpec((tile_r, tile_c), lambda i: (i, 0))],
        out_specs=pl.BlockSpec((tile_r, tile_c), lambda i: (i, 0)),
        input_output_aliases=io_aliases,
        cost_estimate=pl.CostEstimate(
            flops=7 * total,
            transcendentals=0,
            bytes_accessed=2 * total * itemsize),
        compiler_params=pltpu.CompilerParams(
            dimension_semantics=("parallel",)),
    )(slab)

    if padded:
        return out_slab.reshape(-1)[:total].reshape(orig_shape)
    return out_slab.reshape(orig_shape)


def _reference(image):
    # pure-jnp reference of the same math, for a sanity check
    x = jnp.clip(image.astype(jnp.float32), -1.0, 1.0)
    u = jnp.floor(jnp.clip((x + 1.0) * 127.5 + 0.5, 0.0, 255.0))
    return (u / 127.5 - 1.0).astype(image.dtype)


if __name__ == "__main__":
    key = jax.random.PRNGKey(0)
    k1, k2 = jax.random.split(key)

    # RGB-ish NCHW images, consistent with the module. Three small shapes exercise:
    #  - tiny single-block in-place-alias path,
    #  - multi-step grid with a partial final block (no pad, no slice),
    #  - the rare pad fallback (total not a multiple of 128).
    shapes = [
        (2, 3, 16, 16),
        (1, 3, 128, 144),
        (2, 3, 15, 15),
    ]

    ok = True
    for idx, shp in enumerate(shapes):
        ki = jax.random.fold_in(k1, idx)
        image = jax.random.uniform(ki, shp, jnp.float32, minval=-1.5, maxval=1.5)
        cover = jax.random.uniform(k2, shp, jnp.float32, minval=-1.0, maxval=1.0)

        out = jax.block_until_ready(mobilefaceswap_forward(image, cover))
        ref = _reference(image)

        ok &= (out.shape == image.shape) and (out.dtype == image.dtype)
        ok &= bool(jnp.max(jnp.abs(out - ref)) < 1e-5)

    assert ok
    print("KERNEL_OK")
</pallas_src>

<mosaic_0001>
module attributes {stable_mosaic.version = 11 : i64} {
  func.func @_quant_dequant_kernel(%arg0: i32, %arg1: memref<3x512xf32, #tpu.memory_space<vmem>>, %arg2: memref<3x512xf32, #tpu.memory_space<vmem>>) attributes {dimension_semantics = [#tpu.dimension_semantics<parallel>], iteration_bounds = array<i64: 1>, scalar_prefetch = 0 : i64, scratch_operands = 0 : i64, tpu.core_type = #tpu.core_type<tc>, window_params = [{transform_indices = @transform_0, window_bounds = array<i64: 3, 512>}, {transform_indices = @transform_1, window_bounds = array<i64: 3, 512>}]} {
    %c0 = arith.constant 0 : index
    %c0_0 = arith.constant 0 : index
    %0 = vector.load %arg1[%c0, %c0_0] : memref<3x512xf32, #tpu.memory_space<vmem>>, vector<3x512xf32>
    %cst = arith.constant -1.000000e+00 : f32
    %cst_1 = arith.constant 1.000000e+00 : f32
    %1 = vector.broadcast %cst : f32 to vector<3x512xf32>
    %2 = arith.maximumf %1, %0 : vector<3x512xf32>
    %3 = vector.broadcast %cst_1 : f32 to vector<3x512xf32>
    %4 = arith.minimumf %3, %2 : vector<3x512xf32>
    %cst_2 = arith.constant 1.275000e+02 : f32
    %5 = vector.broadcast %cst_2 : f32 to vector<3x512xf32>
    %6 = arith.mulf %4, %5 : vector<3x512xf32>
    %cst_3 = arith.constant 1.280000e+02 : f32
    %7 = vector.broadcast %cst_3 : f32 to vector<3x512xf32>
    %8 = arith.addf %6, %7 : vector<3x512xf32>
    %9 = math.floor %8 : vector<3x512xf32>
    %cst_4 = arith.constant 0.00784313772 : f32
    %10 = vector.broadcast %cst_4 : f32 to vector<3x512xf32>
    %11 = arith.mulf %9, %10 : vector<3x512xf32>
    %cst_5 = arith.constant 1.000000e+00 : f32
    %12 = vector.broadcast %cst_5 : f32 to vector<3x512xf32>
    %13 = arith.subf %11, %12 : vector<3x512xf32>
    %c0_6 = arith.constant 0 : index
    %c0_7 = arith.constant 0 : index
    %14 = vector.load %arg2[%c0_6, %c0_7] : memref<3x512xf32, #tpu.memory_space<vmem>>, vector<3x512xf32>
    tpu.vector_store %arg2[%c0_6, %c0_7], %13 {strides = array<i32>} : memref<3x512xf32, #tpu.memory_space<vmem>>, vector<3x512xf32>,
    return
  }
  func.func @transform_0(%arg0: i32) -> (i32, i32) {
    %c0_i32 = arith.constant 0 : i32
    %c0_i32_0 = arith.constant 0 : i32
    return %arg0, %c0_i32 : i32, i32
  }
  func.func @transform_1(%arg0: i32) -> (i32, i32) {
    %c0_i32 = arith.constant 0 : i32
    %c0_i32_0 = arith.constant 0 : i32
    return %arg0, %c0_i32 : i32, i32
  }
}

</mosaic_0001>

<llo_original>
// kernel: tpu_custom_call.1
$region0: #{tpu_custom_call.1}
  #allocation0 [shape = 'u32[]', space=smem, size = 0x4, offset = 0x4, fixed_abs, tag = 'smem constant byte address 0x4 - core index']
  #allocation1 [shape = 'u32[144,128]{1,0:T(1,128)}', space=vmem, size = 0x12000, scoped, tag = 'internal scratch']
  %s0 = inlined_call_operand.hbm [shape: f32[3,512], index: 0, kind: input, shape index: {}, may-alias: {0,1}]
  %s1 = inlined_call_operand.hbm [shape: f32[3,512], index: 1, kind: output, shape index: {}, may-alias: {0,1}]
  %s2 = sld [smem:[#allocation0]]
  $region18: #{tpu_custom_call.1} parent=0
    _
  %s4 = ssub.s32 1, %s2
  %s5 = scalar_select 0, %s4, %s2
  $region1: #{tpu_custom_call.1} parent=0
    #allocation2 [shape = 'u8[8192]{0}', space=vmem, size = 0x2000, scoped, tag = 'input window, operand 0, single buffered']
    #allocation3 [shape = 's32[1]{0}', space=sflag, size = 0x4, scoped, tag = 'scoped memory for tpu_custom_call.1']
    #allocation4 [shape = 's32[1]{0}', space=sflag, size = 0x4, scoped, tag = 'scoped memory for tpu_custom_call.1']
    #allocation5 [shape = 'u8[8192]{0}', space=vmem, size = 0x2000, scoped, tag = 'output window, operand 0, single buffered']
    %6 = vsyncpa [#allocation3], 0
    %7 = vsyncpa [#allocation4], 0
    // Predicated region
    $region2: #{tpu_custom_call.1} parent=1 // pred_check
      _
    $region3: #{tpu_custom_call.1} parent=1 // pred_check_branch
      %9 = sbr.rel (0) target = $region5
    $region4: #{tpu_custom_call.1} parent=1 // pred_region
      %s11 = ssub.s32 256, 256
      %12 = vsyncadd [#allocation3], %s11
      %s14 = sshll.u32 [#allocation2], 4
      %s15 = int_to_ptr.vmem [resolvable:$true] %s14
      %17 = dma.hbm_to_vmem [thread:$0]  %s0, 256, %s15, [#allocation3]
    $region5: #{tpu_custom_call.1} parent=1 // pred_fallthru
      _
    // Predicated region
    $region6: #{tpu_custom_call.1} parent=1 // pred_check
      _
    $region7: #{tpu_custom_call.1} parent=1 // pred_check_branch
      %19 = sbr.rel (0) target = $region9
    $region8: #{tpu_custom_call.1} parent=1 // pred_region
      %20 = dma.done [#allocation3], 256
    $region9: #{tpu_custom_call.1} parent=1 // pred_fallthru
      _
    %v21 = vld [vmem:[#allocation2] sm:$0x77]
    %v22 = vld [vmem:[#allocation2 + $0x8] sm:$0x77]
    %v23 = vmax.f32 %v21, -1.0
    %v24 = vmax.f32 %v22, -1.0
    %v25 = vmin.f32 %v23, 1.0
    %v26 = vmin.f32 %v24, 1.0
    %v27 = vmul.f32 %v25, 127.5
    %v28 = vmul.f32 %v26, 127.5
    %v29 = vadd.f32 %v27, 128.0
    %v30 = vadd.f32 %v28, 128.0
    %v31 = vfloor.f32 %v29
    %v32 = vfloor.f32 %v30
    %v33 = vmul.f32 %v31, 0.007843138
    %v34 = vmul.f32 %v32, 0.007843138
    %v35 = vsub.f32 %v33, 1.0
    %v36 = vsub.f32 %v34, 1.0
    %37 = vst [vmem:[#allocation5] sm:$0x77] %v35
    %38 = vst [vmem:[#allocation5 + $0x8] sm:$0x77] %v36
    // Predicated region
    $region10: #{tpu_custom_call.1} parent=1 // pred_check
      _
    $region11: #{tpu_custom_call.1} parent=1 // pred_check_branch
      %40 = sbr.rel (0) target = $region13
    $region12: #{tpu_custom_call.1} parent=1 // pred_region
      %s42 = ssub.s32 256, 256
      %43 = vsyncadd [#allocation4], %s42
      %s45 = sshll.u32 [#allocation5], 4
      %s46 = int_to_ptr.vmem [resolvable:$true] %s45
      %48 = dma.vmem_to_hbm [thread:$0]  %s46, 256, %s1, [#allocation4]
    $region13: #{tpu_custom_call.1} parent=1 // pred_fallthru
      _
    // Predicated region
    $region14: #{tpu_custom_call.1} parent=1 // pred_check
      _
    $region15: #{tpu_custom_call.1} parent=1 // pred_check_branch
      %50 = sbr.rel (0) target = $region17
    $region16: #{tpu_custom_call.1} parent=1 // pred_region
      %51 = dma.done [#allocation4], 256
    $region17: #{tpu_custom_call.1} parent=1 // pred_fallthru
      _
    %52 = vsyncpa [#allocation3], 1
    %53 = vsyncpa [#allocation4], 1

</llo_original>
